<compile_context>
chip_gen: v5e
topology: v5e:2x2
jax: 0.10.0
libtpu: 0.0.40
codegen_flags: <defaults>
</compile_context>

<pallas_src>
import math
import functools

import jax
import jax.numpy as jnp
from jax import lax
from jax.experimental import pallas as pl
from jax.experimental.pallas import tpu as pltpu

D_MODEL = 32
MAX_LEN = 5000
DROPOUT_P = 0.1


def _as_i32(v: int) -> int:
    """Wrap an unsigned 32-bit constant into the signed int32 range."""
    v &= 0xFFFFFFFF
    return v - (1 << 32) if v >= (1 << 31) else v


def _lshr(x, n: int):
    """Logical shift-right on int32 (arithmetic shift + mask of the high bits)."""
    mask = (1 << (32 - n)) - 1
    return (x >> n) & mask


def _mix32(x):
    """splitmix32-style avalanche mix on int32 (bit pattern == uint32 math)."""
    x = x ^ _lshr(x, 16)
    x = x * jnp.int32(_as_i32(0x7FEB352D))
    x = x ^ _lshr(x, 15)
    x = x * jnp.int32(_as_i32(0x846CA68B))
    x = x ^ _lshr(x, 16)
    return x


def make_positional_encoding(max_len: int, d_model: int) -> jnp.ndarray:
    """Reference sinusoidal PE buffer, shape (max_len, 1, d_model) (matches torch)."""
    position = jnp.arange(max_len, dtype=jnp.float32)[:, None]
    div_term = jnp.exp(
        jnp.arange(0, d_model, 2, dtype=jnp.float32) * (-math.log(10000.0) / d_model)
    )
    pe = jnp.zeros((max_len, d_model), dtype=jnp.float32)
    pe = pe.at[:, 0::2].set(jnp.sin(position * div_term))
    pe = pe.at[:, 1::2].set(jnp.cos(position * div_term))
    return pe[:, None, :]


def _pe_dropout_kernel(seed_ref, x_ref, freq_ref, odd_ref, o_ref, *,
                       tile_s, bd, keep_prob, apply_dropout):
    i = pl.program_id(0)

    # Global sequence position of every element of this (tile_s, bd) block.
    # (Row r of the (S, B*D) view is exactly sequence position r.)
    row = lax.broadcasted_iota(jnp.int32, (tile_s, bd), 0) + i * tile_s
    pos = row.astype(jnp.float32)

    # Sinusoidal PE recomputed on the fly (EUP transcendentals are free filler
    # in this memory-bound kernel).  freq_ref / odd_ref are tiny (1, bd) rows:
    # column c of the 2-D view is feature d = c % D, odd d uses cos, even uses sin.
    arg = pos * freq_ref[...]
    pe = jnp.where(odd_ref[...] > 0.5, jnp.cos(arg), jnp.sin(arg))

    y = x_ref[...] + pe

    if apply_dropout:
        # Counter-based RNG: unique global element id -> avalanche hash (seed
        # injected between rounds) -> 24-bit uniform -> integer threshold
        # compare.  Tile-independent by construction (no per-tile seed replay).
        col = lax.broadcasted_iota(jnp.int32, (tile_s, bd), 1)
        h = _mix32(row * bd + col)
        h = _mix32(h ^ seed_ref[0])
        r24 = _lshr(h, 8)                                   # uniform in [0, 2**24)
        keep = r24 < jnp.int32(int(keep_prob * (1 << 24)))
        y = jnp.where(keep, y * (1.0 / keep_prob), jnp.zeros_like(y))

    o_ref[...] = y.astype(o_ref.dtype)


def positional_encoding_forward(x, *, seed=0, dropout_p=DROPOUT_P, training=True,
                                max_block_rows=None):
    """x: (seq_len, batch, d_model).  Returns dropout(x + pe[:seq_len]) with the
    same semantics as the PyTorch module (inverted dropout in training mode,
    identity in eval mode)."""
    S, B, D = x.shape
    BD = B * D
    keep_prob = 1.0 - float(dropout_p)
    apply_dropout = bool(training and dropout_p > 0.0)

    # Lane-dense 2-D view of the contiguous (S, B, D) array: (S, B*D) -- free reshape.
    x2d = x.reshape(S, BD)

    # Per-column PE descriptors (column c <-> feature d = c % D), tiny (1, B*D) rows.
    d_idx = jnp.arange(D)
    freq_d = jnp.exp((2 * (d_idx // 2)).astype(jnp.float32) * (-math.log(10000.0) / D))
    odd_d = (d_idx % 2).astype(jnp.float32)
    freq_row = jnp.tile(freq_d, (B,))[None, :]   # (1, B*D)
    odd_row = jnp.tile(odd_d, (B,))[None, :]     # (1, B*D)

    # Tile over the sequence axis.  ~2 MiB per x block -> ~8 MiB VMEM with
    # double-buffered x + out, comfortably inside v7x's smaller VMEM budget.
    bytes_per_row = BD * x.dtype.itemsize
    rows = max(8, (2 * 1024 * 1024) // max(bytes_per_row, 1))
    if max_block_rows is not None:
        rows = min(rows, int(max_block_rows))
    rows = max(8, (rows // 8) * 8)               # keep (8, 128) sublane alignment
    tile_s = S if S <= rows else rows
    grid = (pl.cdiv(S, tile_s),)

    kernel = functools.partial(
        _pe_dropout_kernel, tile_s=tile_s, bd=BD,
        keep_prob=keep_prob, apply_dropout=apply_dropout)
    seed_arr = jnp.array([seed], dtype=jnp.int32)

    out2d = pl.pallas_call(
        kernel,
        out_shape=jax.ShapeDtypeStruct((S, BD), x.dtype),
        grid_spec=pltpu.PrefetchScalarGridSpec(
            num_scalar_prefetch=1,               # seed lives in SMEM
            grid=grid,
            in_specs=[
                pl.BlockSpec((tile_s, BD), lambda i, sref: (i, 0)),
                pl.BlockSpec((1, BD), lambda i, sref: (0, 0)),
                pl.BlockSpec((1, BD), lambda i, sref: (0, 0)),
            ],
            out_specs=pl.BlockSpec((tile_s, BD), lambda i, sref: (i, 0)),
        ),
        compiler_params=pltpu.CompilerParams(
            dimension_semantics=("parallel",),   # independent tiles; 2 TCs on v7x
        ),
    )(seed_arr, x2d, freq_row, odd_row)

    return out2d.reshape(S, B, D)


if __name__ == "__main__":
    key = jax.random.PRNGKey(0)

    # Small shape consistent with the module (seq=8, batch=2, d_model=32).
    SEQ, BATCH = 8, 2
    x = jax.random.normal(key, (SEQ, BATCH, D_MODEL), dtype=jnp.float32)

    pe_full = make_positional_encoding(MAX_LEN, D_MODEL)

    y_train = jax.block_until_ready(positional_encoding_forward(x, seed=0, training=True))
    y_eval = jax.block_until_ready(positional_encoding_forward(x, seed=0, training=False))
    ref_eval = x + pe_full[:SEQ]
    assert y_train.shape == (SEQ, BATCH, D_MODEL)
    # tolerance: sin/cos may come from different transcendental impls (kernel vs XLA)
    assert jnp.allclose(y_eval, ref_eval, atol=1e-4), "eval-mode mismatch vs reference"

    # Larger shape exercising the tiled grid (grid=(4,)) and fully lane-dense
    # blocks (B*D = 128), still tiny enough to run fast everywhere.
    S2, B2 = 256, 4
    x2 = jax.random.normal(jax.random.PRNGKey(1), (S2, B2, D_MODEL), dtype=jnp.float32)
    ref2 = x2 + pe_full[:S2]

    y2_eval = jax.block_until_ready(
        positional_encoding_forward(x2, seed=0, training=False, max_block_rows=64))
    assert jnp.allclose(y2_eval, ref2, atol=1e-4), "tiled eval-mode mismatch"

    y2_train = jax.block_until_ready(
        positional_encoding_forward(x2, seed=7, training=True, max_block_rows=64))
    keep_prob = 1.0 - DROPOUT_P
    zero_frac = float(jnp.mean((y2_train == 0.0).astype(jnp.float32)))
    assert 0.02 < zero_frac < 0.25, f"dropout zero fraction looks wrong: {zero_frac}"
    recon = jnp.where(y2_train != 0.0, y2_train * keep_prob, ref2)
    assert jnp.allclose(recon, ref2, atol=1e-4), "dropout scaling mismatch"

    print("KERNEL_OK")
</pallas_src>

<mosaic_0001>
module attributes {stable_mosaic.version = 11 : i64} {
  func.func @_pe_dropout_kernel(%arg0: i32, %arg1: memref<1xi32, #tpu.memory_space<smem>>, %arg2: memref<8x64xf32, #tpu.memory_space<vmem>>, %arg3: memref<1x64xf32, #tpu.memory_space<vmem>>, %arg4: memref<1x64xf32, #tpu.memory_space<vmem>>, %arg5: memref<8x64xf32, #tpu.memory_space<vmem>>) attributes {dimension_semantics = [#tpu.dimension_semantics<parallel>], iteration_bounds = array<i64: 1>, scalar_prefetch = 1 : i64, scratch_operands = 0 : i64, tpu.core_type = #tpu.core_type<tc>, window_params = [{transform_indices = @transform_0, window_bounds = array<i64: 8, 64>}, {pipeline_mode = #tpu.pipeline_mode<synchronous>, transform_indices = @transform_1, window_bounds = array<i64: 1, 64>}, {pipeline_mode = #tpu.pipeline_mode<synchronous>, transform_indices = @transform_2, window_bounds = array<i64: 1, 64>}, {transform_indices = @transform_3, window_bounds = array<i64: 8, 64>}]} {
    %0 = tpu.iota {dimensions = array<i32: 0>} : vector<8x64xi32>
    %c8_i32 = arith.constant 8 : i32
    %1 = arith.muli %arg0, %c8_i32 : i32
    %2 = vector.broadcast %1 : i32 to vector<8x64xi32>
    %3 = arith.addi %0, %2 : vector<8x64xi32>
    %4 = arith.sitofp %3 : vector<8x64xi32> to vector<8x64xf32>
    %c0 = arith.constant 0 : index
    %c0_0 = arith.constant 0 : index
    %5 = vector.load %arg3[%c0, %c0_0] : memref<1x64xf32, #tpu.memory_space<vmem>>, vector<1x64xf32>
    %6 = vector.broadcast %5 : vector<1x64xf32> to vector<8x64xf32>
    %7 = arith.mulf %4, %6 : vector<8x64xf32>
    %c0_1 = arith.constant 0 : index
    %c0_2 = arith.constant 0 : index
    %8 = vector.load %arg4[%c0_1, %c0_2] : memref<1x64xf32, #tpu.memory_space<vmem>>, vector<1x64xf32>
    %cst = arith.constant 5.000000e-01 : f32
    %9 = vector.broadcast %cst : f32 to vector<1x64xf32>
    %10 = arith.cmpf ogt, %8, %9 : vector<1x64xf32>
    %11 = math.cos %7 : vector<8x64xf32>
    %12 = math.sin %7 : vector<8x64xf32>
    %13 = vector.shape_cast %10 : vector<1x64xi1> to vector<1x64xi1>
    %14 = vector.broadcast %13 : vector<1x64xi1> to vector<8x64xi1>
    %15 = arith.select %14, %11, %12 : vector<8x64xi1>, vector<8x64xf32>
    %c0_3 = arith.constant 0 : index
    %c0_4 = arith.constant 0 : index
    %16 = vector.load %arg2[%c0_3, %c0_4] : memref<8x64xf32, #tpu.memory_space<vmem>>, vector<8x64xf32>
    %17 = arith.addf %16, %15 : vector<8x64xf32>
    %18 = tpu.iota {dimensions = array<i32: 1>} : vector<8x64xi32>
    %c64_i32 = arith.constant 64 : i32
    %19 = vector.broadcast %c64_i32 : i32 to vector<8x64xi32>
    %20 = arith.muli %3, %19 : vector<8x64xi32>
    %21 = arith.addi %20, %18 : vector<8x64xi32>
    %c16_i32 = arith.constant 16 : i32
    %22 = vector.broadcast %c16_i32 : i32 to vector<8x64xi32>
    %23 = arith.shrsi %21, %22 : vector<8x64xi32>
    %c65535_i32 = arith.constant 65535 : i32
    %24 = vector.broadcast %c65535_i32 : i32 to vector<8x64xi32>
    %25 = arith.andi %23, %24 : vector<8x64xi32>
    %26 = arith.xori %21, %25 : vector<8x64xi32>
    %c2146121005_i32 = arith.constant 2146121005 : i32
    %27 = vector.broadcast %c2146121005_i32 : i32 to vector<8x64xi32>
    %28 = arith.muli %26, %27 : vector<8x64xi32>
    %c15_i32 = arith.constant 15 : i32
    %29 = vector.broadcast %c15_i32 : i32 to vector<8x64xi32>
    %30 = arith.shrsi %28, %29 : vector<8x64xi32>
    %c131071_i32 = arith.constant 131071 : i32
    %31 = vector.broadcast %c131071_i32 : i32 to vector<8x64xi32>
    %32 = arith.andi %30, %31 : vector<8x64xi32>
    %33 = arith.xori %28, %32 : vector<8x64xi32>
    %c-2073254261_i32 = arith.constant -2073254261 : i32
    %34 = vector.broadcast %c-2073254261_i32 : i32 to vector<8x64xi32>
    %35 = arith.muli %33, %34 : vector<8x64xi32>
    %c16_i32_5 = arith.constant 16 : i32
    %36 = vector.broadcast %c16_i32_5 : i32 to vector<8x64xi32>
    %37 = arith.shrsi %35, %36 : vector<8x64xi32>
    %c65535_i32_6 = arith.constant 65535 : i32
    %38 = vector.broadcast %c65535_i32_6 : i32 to vector<8x64xi32>
    %39 = arith.andi %37, %38 : vector<8x64xi32>
    %40 = arith.xori %35, %39 : vector<8x64xi32>
    %c0_7 = arith.constant 0 : index
    %41 = memref.load %arg1[%c0_7] : memref<1xi32, #tpu.memory_space<smem>>
    %42 = vector.broadcast %41 : i32 to vector<8x64xi32>
    %43 = arith.xori %40, %42 : vector<8x64xi32>
    %c16_i32_8 = arith.constant 16 : i32
    %44 = vector.broadcast %c16_i32_8 : i32 to vector<8x64xi32>
    %45 = arith.shrsi %43, %44 : vector<8x64xi32>
    %c65535_i32_9 = arith.constant 65535 : i32
    %46 = vector.broadcast %c65535_i32_9 : i32 to vector<8x64xi32>
    %47 = arith.andi %45, %46 : vector<8x64xi32>
    %48 = arith.xori %43, %47 : vector<8x64xi32>
    %c2146121005_i32_10 = arith.constant 2146121005 : i32
    %49 = vector.broadcast %c2146121005_i32_10 : i32 to vector<8x64xi32>
    %50 = arith.muli %48, %49 : vector<8x64xi32>
    %c15_i32_11 = arith.constant 15 : i32
    %51 = vector.broadcast %c15_i32_11 : i32 to vector<8x64xi32>
    %52 = arith.shrsi %50, %51 : vector<8x64xi32>
    %c131071_i32_12 = arith.constant 131071 : i32
    %53 = vector.broadcast %c131071_i32_12 : i32 to vector<8x64xi32>
    %54 = arith.andi %52, %53 : vector<8x64xi32>
    %55 = arith.xori %50, %54 : vector<8x64xi32>
    %c-2073254261_i32_13 = arith.constant -2073254261 : i32
    %56 = vector.broadcast %c-2073254261_i32_13 : i32 to vector<8x64xi32>
    %57 = arith.muli %55, %56 : vector<8x64xi32>
    %c16_i32_14 = arith.constant 16 : i32
    %58 = vector.broadcast %c16_i32_14 : i32 to vector<8x64xi32>
    %59 = arith.shrsi %57, %58 : vector<8x64xi32>
    %c65535_i32_15 = arith.constant 65535 : i32
    %60 = vector.broadcast %c65535_i32_15 : i32 to vector<8x64xi32>
    %61 = arith.andi %59, %60 : vector<8x64xi32>
    %62 = arith.xori %57, %61 : vector<8x64xi32>
    %c8_i32_16 = arith.constant 8 : i32
    %63 = vector.broadcast %c8_i32_16 : i32 to vector<8x64xi32>
    %64 = arith.shrsi %62, %63 : vector<8x64xi32>
    %c16777215_i32 = arith.constant 16777215 : i32
    %65 = vector.broadcast %c16777215_i32 : i32 to vector<8x64xi32>
    %66 = arith.andi %64, %65 : vector<8x64xi32>
    %c15099494_i32 = arith.constant 15099494 : i32
    %67 = vector.broadcast %c15099494_i32 : i32 to vector<8x64xi32>
    %68 = arith.cmpi slt, %66, %67 : vector<8x64xi32>
    %cst_17 = arith.constant 1.11111116 : f32
    %69 = vector.broadcast %cst_17 : f32 to vector<8x64xf32>
    %70 = arith.mulf %17, %69 : vector<8x64xf32>
    %cst_18 = arith.constant 0.000000e+00 : f32
    %71 = vector.broadcast %cst_18 : f32 to vector<8x64xf32>
    %72 = arith.select %68, %70, %71 : vector<8x64xi1>, vector<8x64xf32>
    %c0_19 = arith.constant 0 : index
    %c0_20 = arith.constant 0 : index
    %73 = vector.load %arg5[%c0_19, %c0_20] : memref<8x64xf32, #tpu.memory_space<vmem>>, vector<8x64xf32>
    tpu.vector_store %arg5[%c0_19, %c0_20], %72 {strides = array<i32>} : memref<8x64xf32, #tpu.memory_space<vmem>>, vector<8x64xf32>,
    return
  }
  func.func @transform_0(%arg0: i32, %arg1: memref<1xi32, #tpu.memory_space<smem>>) -> (i32, i32) {
    %c0_i32 = arith.constant 0 : i32
    %c0_i32_0 = arith.constant 0 : i32
    return %arg0, %c0_i32 : i32, i32
  }
  func.func @transform_1(%arg0: i32, %arg1: memref<1xi32, #tpu.memory_space<smem>>) -> (i32, i32) {
    %c0_i32 = arith.constant 0 : i32
    %c0_i32_0 = arith.constant 0 : i32
    %c0_i32_1 = arith.constant 0 : i32
    return %c0_i32, %c0_i32_0 : i32, i32
  }
  func.func @transform_2(%arg0: i32, %arg1: memref<1xi32, #tpu.memory_space<smem>>) -> (i32, i32) {
    %c0_i32 = arith.constant 0 : i32
    %c0_i32_0 = arith.constant 0 : i32
    %c0_i32_1 = arith.constant 0 : i32
    return %c0_i32, %c0_i32_0 : i32, i32
  }
  func.func @transform_3(%arg0: i32, %arg1: memref<1xi32, #tpu.memory_space<smem>>) -> (i32, i32) {
    %c0_i32 = arith.constant 0 : i32
    %c0_i32_0 = arith.constant 0 : i32
    return %arg0, %c0_i32 : i32, i32
  }
}

</mosaic_0001>

<llo_original>
// kernel: tpu_custom_call.1
$region0: #{tpu_custom_call.1}
  #allocation0 [shape = 'u32[]', space=smem, size = 0x4, offset = 0x4, fixed_abs, tag = 'smem constant byte address 0x4 - core index']
  #allocation1 [shape = 'u32[72,128]{1,0:T(1,128)}', space=vmem, size = 0x9000, scoped, tag = 'internal scratch']
  #allocation2 [shape = 's32[1]{0}', space=sflag, size = 0x4, scoped, tag = 'scoped memory for tpu_custom_call.1']
  #allocation3 [shape = 's32[1]{0:T(128)S(6)}', space=smem, size = 0x200, scoped, tag = 'prefetched SMEM operand 0']
  %s0 = inlined_call_operand.<no memory space> [shape: s32[1], index: 0, kind: input, shape index: {}]
  %s1 = inlined_call_operand.hbm [shape: f32[8,64], index: 1, kind: input, shape index: {}]
  %s2 = inlined_call_operand.vmem [shape: f32[1,64], index: 2, kind: input, shape index: {}]
  %s3 = inlined_call_operand.vmem [shape: f32[1,64], index: 3, kind: input, shape index: {}]
  %s4 = inlined_call_operand.hbm [shape: f32[8,64], index: 4, kind: output, shape index: {}]
  %s5 = sld [smem:[#allocation0]]
  $region26: #{tpu_custom_call.1} parent=0
    _
  %s7 = ssub.s32 1, %s5
  %s8 = scalar_select 0, %s7, %s5
  %9 = sst [smem:[#allocation3]] %s0
  $region1: #{tpu_custom_call.1} parent=0
    #allocation4 [shape = 'u8[4096]{0}', space=vmem, size = 0x1000, scoped, tag = 'input window, operand 1, single buffered']
    #allocation5 [shape = 's32[1]{0}', space=sflag, size = 0x4, scoped, tag = 'scoped memory for tpu_custom_call.1']
    #allocation6 [shape = 's32[1]{0}', space=sflag, size = 0x4, scoped, tag = 'scoped memory for tpu_custom_call.1']
    #allocation7 [shape = 'u8[4096]{0}', space=vmem, size = 0x1000, scoped, tag = 'output window, operand 0, single buffered']
    %10 = vsyncpa [#allocation5], 0
    %11 = vsyncpa [#allocation6], 0
    // Predicated region
    $region2: #{tpu_custom_call.1} parent=1 // pred_check
      _
    $region3: #{tpu_custom_call.1} parent=1 // pred_check_branch
      %13 = sbr.rel (0) target = $region5
    $region4: #{tpu_custom_call.1} parent=1 // pred_region
      %15 = vsyncadd [#allocation5], 0
      %s17 = sshll.u32 %s1, 4
      %s18 = int_to_ptr.hbm [resolvable:$true] %s17
      %s19 = sshll.u32 [#allocation4], 4
      %s20 = int_to_ptr.vmem [resolvable:$true] %s19
      %22 = dma.hbm_to_vmem [thread:$0]  %s18, 128, %s20, [#allocation5]
    $region5: #{tpu_custom_call.1} parent=1 // pred_fallthru
      _
    // Predicated region
    $region6: #{tpu_custom_call.1} parent=1 // pred_check
      _
    $region7: #{tpu_custom_call.1} parent=1 // pred_check_branch
      %24 = sbr.rel (0) target = $region9
    $region8: #{tpu_custom_call.1} parent=1 // pred_region
      _
    $region9: #{tpu_custom_call.1} parent=1 // pred_fallthru
      _
    // Predicated region
    $region10: #{tpu_custom_call.1} parent=1 // pred_check
      _
    $region11: #{tpu_custom_call.1} parent=1 // pred_check_branch
      %26 = sbr.rel (0) target = $region13
    $region12: #{tpu_custom_call.1} parent=1 // pred_region
      _
    $region13: #{tpu_custom_call.1} parent=1 // pred_fallthru
      _
    // Predicated region
    $region14: #{tpu_custom_call.1} parent=1 // pred_check
      _
    $region15: #{tpu_custom_call.1} parent=1 // pred_check_branch
      %28 = sbr.rel (0) target = $region17
    $region16: #{tpu_custom_call.1} parent=1 // pred_region
      %30 = dma.done [#allocation5], 128
    $region17: #{tpu_custom_call.1} parent=1 // pred_fallthru
      _
    %v31 = vlaneseq
    %v32 = vshrl.u32 %v31, 7
    %s33 = smul.u32 0, 8
    %v34 = vstv %s33
    %v35 = vadd.s32 %v32, %v34
    %v36 = vcvt.s32.f32 %v35
    %v37 = vld [vmem:[%s2] sm:$0x1]
    %v39 = vperm.slane %v37, 0
    %v41 = vmul.f32 %v36, %v39
    %v42 = vld [vmem:[%s3] sm:$0x1]
    %vm43 = vcmp.gt.f32.partialorder %v42, 0.5
    %v44 = vand.u32 2147483647, %v41
    %vm45 = vcmp.le.f32.partialorder %v44, 0.7853982
    %vm46 = vcmp.lt.s32.totalorder %v41, 0
    %v47 = vand.u32 %v41, 2139095040
    %v48 = vshrl.u32 %v47, 23
    %v49 = vsub.s32 %v48, 127
    %v50 = vand.u32 2147483647, %v41
    %v51 = vand.u32 %v50, 8388607
    %v52 = vor.u32 %v51, 8388608
    %v53 = vsub.s32 0, %v52
    %v54 = vadd.s32 %v49, 1
    %vm55 = vcmp.gt.s32.totalorder %v54, 0
    %v56 = vsel %vm55, %v54, 0
    %v57 = vshrl.u32 %v56, 5
    %v58 = vand.u32 %v56, 31
    %v59 = vsub.s32 32, %v58
    %v60 = vshrl.u32 683565275, %v59
    %v61 = vshll.u32 683565275, %v58
    %v62 = vshrl.u32 2475754826, %v59
    %v63 = vor.u32 %v61, %v62
    %v64 = vshll.u32 2475754826, %v58
    %v65 = vshrl.u32 2131351028, %v59
    %v66 = vor.u32 %v64, %v65
    %v67 = vshll.u32 2131351028, %v58
    %v68 = vshrl.u32 2102212464, %v59
    %v69 = vor.u32 %v67, %v68
    %v70 = vshll.u32 2102212464, %v58
    %v71 = vshrl.u32 920167782, %v59
    %v72 = vor.u32 %v70, %v71
    %v73 = vshll.u32 920167782, %v58
    %v74 = vshrl.u32 1326507024, %v59
    %v75 = vor.u32 %v73, %v74
    %vm76 = vcmp.lt.s32.totalorder %v57, 1
    %vm77 = vcmp.lt.s32.totalorder %v57, 2
    %vm78 = vcmp.lt.s32.totalorder %v57, 3
    %vm79 = vcmp.lt.s32.totalorder %v57, 4
    %v80 = vsel %vm76, %v60, %v63
    %v81 = vsel %vm79, %v69, 2102212464
    %v82 = vsel %vm78, %v66, %v81
    %v83 = vsel %vm77, %v80, %v82
    %v84 = vsel %vm76, %v63, %v66
    %v85 = vsel %vm79, %v72, 920167782
    %v86 = vsel %vm78, %v69, %v85
    %v87 = vsel %vm77, %v84, %v86
    %v88 = vsel %vm76, %v66, %v69
    %v89 = vsel %vm79, %v75, 1326507024
    %v90 = vsel %vm78, %v72, %v89
    %v91 = vsel %vm77, %v88, %v90
    %v92 = vshll.u32 %v52, 8
    %v93 = vand.u32 %v92, 65535
    %v94 = vshrl.u32 %v92, 16
    %v95 = vand.u32 %v91, 65535
    %v96 = vshrl.u32 %v91, 16
    %v97 = vmul.u32 %v93, %v95
    %v98 = vmul.u32 %v93, %v96
    %v99 = vmul.u32 %v94, %v95
    %v100 = vmul.u32 %v94, %v96
    %v101 = vshll.u32 %v98, 16
    %v102 = vshrl.u32 %v98, 16
    %v103 = vshll.u32 %v99, 16
    %v104 = vshrl.u32 %v99, 16
    %vm105 = vc.u32 %v97, %v101
    %v106 = vsel %vm105, 1, 0
    %v107 = vadd.s32 %v97, %v101
    %v108 = vadd.s32 %v100, %v106
    %vm109 = vc.u32 %v107, %v103
    %v110 = vsel %vm109, 1, 0
    %v111 = vadd.s32 %v107, %v103
    %v112 = vadd.s32 %v108, %v110
    %v113 = vadd.s32 %v112, %v102
    %v114 = vadd.s32 %v113, %v104
    %v115 = vand.u32 %v92, 65535
    %v116 = vshrl.u32 %v92, 16
    %v117 = vand.u32 %v87, 65535
    %v118 = vshrl.u32 %v87, 16
    %v119 = vmul.u32 %v115, %v117
    %v120 = vmul.u32 %v115, %v118
    %v121 = vmul.u32 %v116, %v117
    %v122 = vmul.u32 %v116, %v118
    %v123 = vshll.u32 %v120, 16
    %v124 = vshrl.u32 %v120, 16
    %v125 = vshll.u32 %v121, 16
    %v126 = vshrl.u32 %v121, 16
    %vm127 = vc.u32 %v119, %v123
    %v128 = vsel %vm127, 1, 0
    %v129 = vadd.s32 %v119, %v123
    %v130 = vadd.s32 %v122, %v128
    %vm131 = vc.u32 %v129, %v125
    %v132 = vsel %vm131, 1, 0
    %v133 = vadd.s32 %v129, %v125
    %v134 = vadd.s32 %v130, %v132
    %v135 = vadd.s32 %v134, %v124
    %v136 = vadd.s32 %v135, %v126
    %v137 = vmul.u32 %v92, %v83
    %v138 = vadd.s32 %v114, %v133
    %vm139 = vc.u32 %v114, %v133
    %v140 = vadd.s32 %v136, 1
    %v141 = vsel %vm139, %v140, %v136
    %v142 = vadd.s32 %v137, %v141
    %v143 = vadd.s32 %v142, 536870912
    %v144 = vshrl.u32 %v143, 30
    %v145 = vshll.u32 %v144, 30
    %v146 = vsub.s32 %v142, %v145
    %vm147 = vcmp.lt.s32.totalorder %v146, 0
    %v148 = vsub.s32 0, %v146
    %v149 = vsel %vm147, %v148, %v146
    %v150 = vclz %v149
    %v151 = vsub.s32 %v150, 2
    %vm152 = vcmp.gt.s32.totalorder 0, %v151
    %v153 = vsel %vm152, 0, %v151
    %v154 = vsub.s32 32, %v153
    %v155 = vshll.u32 %v146, %v153
    %v156 = vshrl.u32 %v138, %v154
    %v157 = vor.u32 %v155, %v156
    %v158 = vsub.s32 4294967266, %v153
    %v159 = vadd.s32 %v158, 127
    %v160 = vshll.u32 %v159, 23
    %v161 = vor.u32 4788187, %v160
    %v162 = vand.u32 2147483647, %v161
    %v164 = vcvt.s32.f32 %v157
    %v165 = vmul.f32 %v164, %v162
    %v166 = vxor.u32 %v165, 2147483648
    %v167 = vsel %vm46, %v166, %v165
    %v168 = vsub.s32 4, %v144
    %v169 = vsel %vm46, %v168, %v144
    %v170 = vsel %vm45, %v41, %v167
    %v171 = vsel %vm45, 0, %v169
    %v172 = vmul.f32 %v170, %v170
    %v173 = vmul.f32 %v172, -0.001358992
    %v174 = vadd.f32 %v173, 0.041655596
    %v175 = vmul.f32 %v172, %v174
    %v176 = vadd.f32 %v175, -0.4999988
    %v177 = vmul.f32 %v172, %v176
    %v178 = vadd.f32 1.0, %v177
    %v179 = vmul.f32 %v170, %v170
    %v180 = vmul.f32 %v179, -0.00019511016
    %v181 = vadd.f32 %v180, 0.008332121
    %v182 = vmul.f32 %v179, %v181
    %v183 = vadd.f32 %v182, -0.16666654
    %v184 = vmul.f32 %v179, %v183
    %v185 = vadd.f32 %v184, 1.0
    %v186 = vmul.f32 %v185, %v170
    %vm187 = vweird.f32 %v41
    %v188 = vand.u32 %v171, 3
    %vm189 = vcmp.lt.s32.totalorder %v188, 2
    %vm190 = vcmp.eq.s32.totalorder %v188, 0
    %v191 = vxor.u32 %v186, 2147483648
    %v192 = vsel %vm190, %v178, %v191
    %vm193 = vcmp.eq.s32.totalorder %v188, 2
    %v194 = vxor.u32 %v178, 2147483648
    %v195 = vsel %vm193, %v194, %v186
    %v196 = vsel %vm189, %v192, %v195
    %v197 = vsel %vm187, nan, %v196
    %v198 = vand.u32 2147483647, %v41
    %vm199 = vcmp.le.f32.partialorder %v198, 0.7853982
    %vm200 = vcmp.lt.s32.totalorder %v41, 0
    %v201 = vand.u32 %v41, 2139095040
    %v202 = vshrl.u32 %v201, 23
    %v203 = vsub.s32 %v202, 127
    %v204 = vand.u32 2147483647, %v41
    %v205 = vand.u32 %v204, 8388607
    %v206 = vor.u32 %v205, 8388608
    %v207 = vsub.s32 0, %v206
    %v208 = vadd.s32 %v203, 1
    %vm209 = vcmp.gt.s32.totalorder %v208, 0
    %v210 = vsel %vm209, %v208, 0
    %v211 = vshrl.u32 %v210, 5
    %v212 = vand.u32 %v210, 31
    %v213 = vsub.s32 32, %v212
    %v214 = vshrl.u32 683565275, %v213
    %v215 = vshll.u32 683565275, %v212
    %v216 = vshrl.u32 2475754826, %v213
    %v217 = vor.u32 %v215, %v216
    %v218 = vshll.u32 2475754826, %v212
    %v219 = vshrl.u32 2131351028, %v213
    %v220 = vor.u32 %v218, %v219
    %v221 = vshll.u32 2131351028, %v212
    %v222 = vshrl.u32 2102212464, %v213
    %v223 = vor.u32 %v221, %v222
    %v224 = vshll.u32 2102212464, %v212
    %v225 = vshrl.u32 920167782, %v213
    %v226 = vor.u32 %v224, %v225
    %v227 = vshll.u32 920167782, %v212
    %v228 = vshrl.u32 1326507024, %v213
    %v229 = vor.u32 %v227, %v228
    %vm230 = vcmp.lt.s32.totalorder %v211, 1
    %vm231 = vcmp.lt.s32.totalorder %v211, 2
    %vm232 = vcmp.lt.s32.totalorder %v211, 3
    %vm233 = vcmp.lt.s32.totalorder %v211, 4
    %v234 = vsel %vm230, %v214, %v217
    %v235 = vsel %vm233, %v223, 2102212464
    %v236 = vsel %vm232, %v220, %v235
    %v237 = vsel %vm231, %v234, %v236
    %v238 = vsel %vm230, %v217, %v220
    %v239 = vsel %vm233, %v226, 920167782
    %v240 = vsel %vm232, %v223, %v239
    %v241 = vsel %vm231, %v238, %v240
    %v242 = vsel %vm230, %v220, %v223
    %v243 = vsel %vm233, %v229, 1326507024
    %v244 = vsel %vm232, %v226, %v243
    %v245 = vsel %vm231, %v242, %v244
    %v246 = vshll.u32 %v206, 8
    %v247 = vand.u32 %v246, 65535
    %v248 = vshrl.u32 %v246, 16
    %v249 = vand.u32 %v245, 65535
    %v250 = vshrl.u32 %v245, 16
    %v251 = vmul.u32 %v247, %v249
    %v252 = vmul.u32 %v247, %v250
    %v253 = vmul.u32 %v248, %v249
    %v254 = vmul.u32 %v248, %v250
    %v255 = vshll.u32 %v252, 16
    %v256 = vshrl.u32 %v252, 16
    %v257 = vshll.u32 %v253, 16
    %v258 = vshrl.u32 %v253, 16
    %vm259 = vc.u32 %v251, %v255
    %v260 = vsel %vm259, 1, 0
    %v261 = vadd.s32 %v251, %v255
    %v262 = vadd.s32 %v254, %v260
    %vm263 = vc.u32 %v261, %v257
    %v264 = vsel %vm263, 1, 0
    %v265 = vadd.s32 %v261, %v257
    %v266 = vadd.s32 %v262, %v264
    %v267 = vadd.s32 %v266, %v256
    %v268 = vadd.s32 %v267, %v258
    %v269 = vand.u32 %v246, 65535
    %v270 = vshrl.u32 %v246, 16
    %v271 = vand.u32 %v241, 65535
    %v272 = vshrl.u32 %v241, 16
    %v273 = vmul.u32 %v269, %v271
    %v274 = vmul.u32 %v269, %v272
    %v275 = vmul.u32 %v270, %v271
    %v276 = vmul.u32 %v270, %v272
    %v277 = vshll.u32 %v274, 16
    %v278 = vshrl.u32 %v274, 16
    %v279 = vshll.u32 %v275, 16
    %v280 = vshrl.u32 %v275, 16
    %vm281 = vc.u32 %v273, %v277
    %v282 = vsel %vm281, 1, 0
    %v283 = vadd.s32 %v273, %v277
    %v284 = vadd.s32 %v276, %v282
    %vm285 = vc.u32 %v283, %v279
    %v286 = vsel %vm285, 1, 0
    %v287 = vadd.s32 %v283, %v279
    %v288 = vadd.s32 %v284, %v286
    %v289 = vadd.s32 %v288, %v278
    %v290 = vadd.s32 %v289, %v280
    %v291 = vmul.u32 %v246, %v237
    %v292 = vadd.s32 %v268, %v287
    %vm293 = vc.u32 %v268, %v287
    %v294 = vadd.s32 %v290, 1
    %v295 = vsel %vm293, %v294, %v290
    %v296 = vadd.s32 %v291, %v295
    %v297 = vadd.s32 %v296, 536870912
    %v298 = vshrl.u32 %v297, 30
    %v299 = vshll.u32 %v298, 30
    %v300 = vsub.s32 %v296, %v299
    %vm301 = vcmp.lt.s32.totalorder %v300, 0
    %v302 = vsub.s32 0, %v300
    %v303 = vsel %vm301, %v302, %v300
    %v304 = vclz %v303
    %v305 = vsub.s32 %v304, 2
    %vm306 = vcmp.gt.s32.totalorder 0, %v305
    %v307 = vsel %vm306, 0, %v305
    %v308 = vsub.s32 32, %v307
    %v309 = vshll.u32 %v300, %v307
    %v310 = vshrl.u32 %v292, %v308
    %v311 = vor.u32 %v309, %v310
    %v312 = vsub.s32 4294967266, %v307
    %v313 = vadd.s32 %v312, 127
    %v314 = vshll.u32 %v313, 23
    %v315 = vor.u32 4788187, %v314
    %v316 = vand.u32 2147483647, %v315
    %v318 = vcvt.s32.f32 %v311
    %v319 = vmul.f32 %v318, %v316
    %v320 = vxor.u32 %v319, 2147483648
    %v321 = vsel %vm200, %v320, %v319
    %v322 = vsub.s32 4, %v298
    %v323 = vsel %vm200, %v322, %v298
    %v324 = vsel %vm199, %v41, %v321
    %v325 = vsel %vm199, 0, %v323
    %v326 = vmul.f32 %v324, %v324
    %v327 = vmul.f32 %v326, -0.001358992
    %v328 = vadd.f32 %v327, 0.041655596
    %v329 = vmul.f32 %v326, %v328
    %v330 = vadd.f32 %v329, -0.4999988
    %v331 = vmul.f32 %v326, %v330
    %v332 = vadd.f32 1.0, %v331
    %v333 = vmul.f32 %v324, %v324
    %v334 = vmul.f32 %v333, -0.00019511016
    %v335 = vadd.f32 %v334, 0.008332121
    %v336 = vmul.f32 %v333, %v335
    %v337 = vadd.f32 %v336, -0.16666654
    %v338 = vmul.f32 %v333, %v337
    %v339 = vadd.f32 %v338, 1.0
    %v340 = vmul.f32 %v339, %v324
    %vm341 = vweird.f32 %v41
    %v342 = vadd.s32 %v325, 3
    %v343 = vand.u32 %v342, 3
    %vm344 = vcmp.lt.s32.totalorder %v343, 2
    %vm345 = vcmp.eq.s32.totalorder %v343, 0
    %v346 = vxor.u32 %v340, 2147483648
    %v347 = vsel %vm345, %v332, %v346
    %vm348 = vcmp.eq.s32.totalorder %v343, 2
    %v349 = vxor.u32 %v332, 2147483648
    %v350 = vsel %vm348, %v349, %v340
    %v351 = vsel %vm344, %v347, %v350
    %v352 = vsel %vm341, nan, %v351
    %v353 = vsel %vm43, 1, 0
    %v354 = vperm.slane %v353, 0
    %vm355 = vcmp.eq.s32.totalorder %v354, 1
    %v356 = vsel %vm355, %v197, %v352
    %v357 = vld [vmem:[#allocation4] sm:$0xff]
    %v358 = vadd.f32 %v357, %v356
    %v359 = vlaneseq
    %v360 = vand.u32 %v359, 127
    %v361 = vmul.u32 %v35, 64
    %v362 = vadd.s32 %v361, %v360
    %v363 = vshra.s32 %v362, 16
    %v364 = vand.u32 %v363, 65535
    %v365 = vxor.u32 %v362, %v364
    %v366 = vmul.u32 %v365, 2146121005
    %v367 = vshra.s32 %v366, 15
    %v368 = vand.u32 %v367, 131071
    %v369 = vxor.u32 %v366, %v368
    %v370 = vmul.u32 %v369, 2221713035
    %v371 = vshra.s32 %v370, 16
    %v372 = vand.u32 %v371, 65535
    %v373 = vxor.u32 %v370, %v372
    %s374 = sld [smem:[#allocation3]]
    %v375 = vstv %s374
    %v376 = vxor.u32 %v373, %v375
    %v377 = vshra.s32 %v376, 16
    %v378 = vand.u32 %v377, 65535
    %v379 = vxor.u32 %v376, %v378
    %v380 = vmul.u32 %v379, 2146121005
    %v381 = vshra.s32 %v380, 15
    %v382 = vand.u32 %v381, 131071
    %v383 = vxor.u32 %v380, %v382
    %v384 = vmul.u32 %v383, 2221713035
    %v385 = vshra.s32 %v384, 16
    %v386 = vand.u32 %v385, 65535
    %v387 = vxor.u32 %v384, %v386
    %v388 = vshra.s32 %v387, 8
    %v389 = vand.u32 %v388, 16777215
    %vm390 = vcmp.lt.s32.totalorder %v389, 15099494
    %v391 = vmul.f32 %v358, 1.1111112
    %v392 = vsel %vm390, %v391, 0.0
    %vm393 = vcmask 523264
    %394 = vst.msk [vmem:[#allocation7] sm:$0xff] %vm393, %v392
    // Predicated region
    $region18: #{tpu_custom_call.1} parent=1 // pred_check
      _
    $region19: #{tpu_custom_call.1} parent=1 // pred_check_branch
      %396 = sbr.rel (0) target = $region21
    $region20: #{tpu_custom_call.1} parent=1 // pred_region
      %398 = vsyncadd [#allocation6], 0
      %s400 = sshll.u32 [#allocation7], 4
      %s401 = int_to_ptr.vmem [resolvable:$true] %s400
      %s402 = sshll.u32 %s4, 4
      %s403 = int_to_ptr.hbm [resolvable:$true] %s402
      %405 = dma.vmem_to_hbm [thread:$0]  %s401, 128, %s403, [#allocation6]
    $region21: #{tpu_custom_call.1} parent=1 // pred_fallthru
      _
    // Predicated region
    $region22: #{tpu_custom_call.1} parent=1 // pred_check
      _
    $region23: #{tpu_custom_call.1} parent=1 // pred_check_branch
      %407 = sbr.rel (0) target = $region25
    $region24: #{tpu_custom_call.1} parent=1 // pred_region
      %409 = dma.done [#allocation6], 128
    $region25: #{tpu_custom_call.1} parent=1 // pred_fallthru
      _
    %410 = vsyncpa [#allocation5], 1
    %411 = vsyncpa [#allocation6], 1

</llo_original>
